<compile_context>
chip_gen: v5e
topology: v5e:2x2
jax: 0.10.0
libtpu: 0.0.40
codegen_flags: <defaults>
</compile_context>

<pallas_src>
import jax
import jax.numpy as jnp
from jax.experimental import pallas as pl
from jax.experimental.pallas import tpu as pltpu


def _layer_norm(z, gamma, beta, eps=1e-5):
    mean = jnp.mean(z, axis=-1, keepdims=True)
    zc = z - mean
    var = jnp.mean(zc * zc, axis=-1, keepdims=True)
    return zc * jax.lax.rsqrt(var + eps) * gamma + beta


def _ffn_ln_kernel(x_ref, w1_ref, b1_ref, w2_ref, b2_ref, g_ref, beta_ref, o_ref):
    """Resident-weights path: full FFN + residual + LayerNorm per row tile."""
    x_f32 = x_ref[...].astype(jnp.float32)                               # (tm, d_in)
    x_mx = x_f32.astype(w1_ref.dtype)

    h = jnp.dot(x_mx, w1_ref[...], preferred_element_type=jnp.float32)   # (tm, d_hid)
    h = jnp.maximum(h + b1_ref[...], 0.0)

    y = jnp.dot(h.astype(w2_ref.dtype), w2_ref[...],
                preferred_element_type=jnp.float32)                      # (tm, d_in)
    z = y + b2_ref[...] + x_f32                                          # dropout = identity
    o_ref[...] = _layer_norm(z, g_ref[...], beta_ref[...]).astype(o_ref.dtype)


def _ffn_ln_stream_kernel(x_ref, w1_ref, b1_ref, w2_ref, b2_ref, g_ref, beta_ref,
                          o_ref, acc_ref):
    """d_hid-streaming path: accumulate partial second-matmul results over k."""
    k = pl.program_id(1)

    @pl.when(k == 0)
    def _():
        acc_ref[...] = jnp.zeros_like(acc_ref)

    x_f32 = x_ref[...].astype(jnp.float32)                               # (tm, d_in)
    h = jnp.dot(x_f32.astype(w1_ref.dtype), w1_ref[...],
                preferred_element_type=jnp.float32)                      # (tm, tk)
    h = jnp.maximum(h + b1_ref[...], 0.0)                                # ReLU is elementwise -> exact per block
    acc_ref[...] += jnp.dot(h.astype(w2_ref.dtype), w2_ref[...],
                            preferred_element_type=jnp.float32)          # (tm, d_in)

    @pl.when(k == pl.num_programs(1) - 1)
    def _():
        z = acc_ref[...] + b2_ref[...] + x_f32
        o_ref[...] = _layer_norm(z, g_ref[...], beta_ref[...]).astype(o_ref.dtype)


def _round_up(n, m):
    return ((n + m - 1) // m) * m


def _vmem_budget():
    try:
        phys = int(pltpu.get_tpu_info().vmem_capacity_bytes)
    except Exception:
        phys = 64 * 1024 * 1024          # v7x lower bound; safe everywhere
    return (phys * 3) // 4


def positionwise_feed_forward(x, w1, b1, w2, b2, gamma, beta, *,
                              tm=512, matmul_dtype=jnp.bfloat16,
                              io_dtype=None, hid_block=None, force_stream=False):
    """x: (B, L, d_in).  w1: (d_in, d_hid), w2: (d_hid, d_in).  Returns (B, L, d_in)."""
    B, L, d_in = x.shape
    d_hid = w1.shape[1]
    rows = B * L

    # ---- row tile: large, sublane aligned, >= 2 grid steps when possible -----
    tm = _round_up(min(tm, _round_up(rows, 8)), 8)
    if pl.cdiv(rows, tm) < 2 and rows > 8:
        tm = max(8, _round_up(pl.cdiv(rows, 2), 8))
    grid_m = pl.cdiv(rows, tm)

    io_dt = x.dtype if io_dtype is None else jnp.dtype(io_dtype)
    x2d = x.reshape(rows, d_in).astype(io_dt)
    w1_mx = w1.astype(matmul_dtype)
    w2_mx = w2.astype(matmul_dtype)
    b1_2d = b1.reshape(1, d_hid).astype(jnp.float32)
    b2_2d = b2.reshape(1, d_in).astype(jnp.float32)
    g_2d = gamma.reshape(1, d_in).astype(jnp.float32)
    beta_2d = beta.reshape(1, d_in).astype(jnp.float32)

    x_item = jnp.dtype(io_dt).itemsize
    w_item = jnp.dtype(matmul_dtype).itemsize
    budget = _vmem_budget()

    def est_resident(tm_):
        return (4 * tm_ * d_in * x_item                 # x + out tiles, double-buffered
                + 4 * d_in * d_hid * w_item             # W1 + W2 (2 buffers each)
                + 2 * (d_hid + 3 * d_in) * 4            # bias / gamma / beta
                + tm_ * d_in * (8 + w_item)             # x_f32, x cast, z temporaries
                + tm_ * d_hid * (4 + w_item)            # h (f32) + h cast
                + 2 * tm_ * d_in * 4)                   # LayerNorm temporaries

    use_stream = force_stream or est_resident(tm) > budget

    if not use_stream:
        vmem_limit = min(max(int(est_resident(tm) * 1.4) + (1 << 20), 32 << 20), budget)
        out2d = pl.pallas_call(
            _ffn_ln_kernel,
            out_shape=jax.ShapeDtypeStruct((rows, d_in), io_dt),
            grid_spec=pltpu.PrefetchScalarGridSpec(
                num_scalar_prefetch=0,
                grid=(grid_m,),
                in_specs=[
                    pl.BlockSpec((tm, d_in), lambda i: (i, 0)),     # x tile (streamed)
                    pl.BlockSpec((d_in, d_hid), lambda i: (0, 0)),  # W1 (resident)
                    pl.BlockSpec((1, d_hid), lambda i: (0, 0)),     # b1
                    pl.BlockSpec((d_hid, d_in), lambda i: (0, 0)),  # W2 (resident)
                    pl.BlockSpec((1, d_in), lambda i: (0, 0)),      # b2
                    pl.BlockSpec((1, d_in), lambda i: (0, 0)),      # gamma
                    pl.BlockSpec((1, d_in), lambda i: (0, 0)),      # beta
                ],
                out_specs=pl.BlockSpec((tm, d_in), lambda i: (i, 0)),
            ),
            compiler_params=pltpu.CompilerParams(
                dimension_semantics=("parallel",),
                vmem_limit_bytes=vmem_limit),
        )(x2d, w1_mx, b1_2d, w2_mx, b2_2d, g_2d, beta_2d)
        return out2d.reshape(B, L, d_in).astype(x.dtype)

    # ---- d_hid-streaming fallback (large weights / v7x 64 MiB VMEM) ----------
    if hid_block is None:
        tk = d_hid
        for cand in (512, 384, 256, 128):
            if d_hid % cand == 0:
                tk = cand
                break
    else:
        tk = hid_block
    assert d_hid % tk == 0, "hid_block must divide d_hid"
    grid_k = d_hid // tk

    def est_stream(tm_):
        return (4 * tm_ * d_in * x_item                 # x + out tiles
                + 4 * d_in * tk * w_item                # W1/W2 blocks, double-buffered
                + 2 * (tk + 3 * d_in) * 4
                + tm_ * d_in * 4                        # acc scratch
                + tm_ * d_in * (8 + w_item)
                + tm_ * tk * (4 + w_item)
                + 2 * tm_ * d_in * 4)

    while est_stream(tm) > budget and tm > 8:
        tm = max(8, _round_up(tm // 2, 8))
    grid_m = pl.cdiv(rows, tm)
    vmem_limit = min(max(int(est_stream(tm) * 1.4) + (1 << 20), 32 << 20), budget)

    out2d = pl.pallas_call(
        _ffn_ln_stream_kernel,
        out_shape=jax.ShapeDtypeStruct((rows, d_in), io_dt),
        grid_spec=pltpu.PrefetchScalarGridSpec(
            num_scalar_prefetch=0,
            grid=(grid_m, grid_k),
            in_specs=[
                pl.BlockSpec((tm, d_in), lambda i, k: (i, 0)),    # x (held across k)
                pl.BlockSpec((d_in, tk), lambda i, k: (0, k)),    # W1 column block
                pl.BlockSpec((1, tk), lambda i, k: (0, k)),       # b1 block
                pl.BlockSpec((tk, d_in), lambda i, k: (k, 0)),    # W2 row block
                pl.BlockSpec((1, d_in), lambda i, k: (0, 0)),     # b2
                pl.BlockSpec((1, d_in), lambda i, k: (0, 0)),     # gamma
                pl.BlockSpec((1, d_in), lambda i, k: (0, 0)),     # beta
            ],
            out_specs=pl.BlockSpec((tm, d_in), lambda i, k: (i, 0)),
            scratch_shapes=[pltpu.VMEM((tm, d_in), jnp.float32)],
        ),
        compiler_params=pltpu.CompilerParams(
            dimension_semantics=("parallel", "arbitrary"),
            vmem_limit_bytes=vmem_limit),
    )(x2d, w1_mx, b1_2d, w2_mx, b2_2d, g_2d, beta_2d)
    return out2d.reshape(B, L, d_in).astype(x.dtype)


# --------------------------- reference & self-test ---------------------------

def _reference(x, w1, b1, w2, b2, gamma, beta):
    hp = jax.lax.Precision.HIGHEST
    h = jnp.maximum(jnp.einsum("bld,dh->blh", x, w1, precision=hp) + b1, 0.0)
    y = jnp.einsum("blh,hd->bld", h, w2, precision=hp) + b2
    z = y + x
    mean = z.mean(-1, keepdims=True)
    var = ((z - mean) ** 2).mean(-1, keepdims=True)
    return (z - mean) * jax.lax.rsqrt(var + 1e-5) * gamma + beta


def _make_params(key, d_in, d_hid):
    k1, kb1, k2, kb2 = jax.random.split(key, 4)
    # Conv1d(d_in, d_hid, 1) weight is (d_hid, d_in, 1); we store its squeezed
    # transpose so the kernel can do x @ W1 directly.
    w1 = jax.random.normal(k1, (d_in, d_hid), dtype=jnp.float32) * (1.0 / d_in ** 0.5)
    b1 = jax.random.normal(kb1, (d_hid,), dtype=jnp.float32) * 0.02
    w2 = jax.random.normal(k2, (d_hid, d_in), dtype=jnp.float32) * (1.0 / d_hid ** 0.5)
    b2 = jax.random.normal(kb2, (d_in,), dtype=jnp.float32) * 0.02
    gamma = jnp.ones((d_in,), dtype=jnp.float32)
    beta = jnp.zeros((d_in,), dtype=jnp.float32)
    return w1, b1, w2, b2, gamma, beta


if __name__ == "__main__":
    key = jax.random.PRNGKey(0)

    # --- test 1: small module-spec shapes (d_in=32, d_hid=64) -----------------
    B, L, d_in, d_hid = 2, 8, 32, 64
    kx, kp = jax.random.split(key)
    x = jax.random.normal(kx, (B, L, d_in), dtype=jnp.float32)
    params = _make_params(kp, d_in, d_hid)
    ref = _reference(x, *params)

    out = jax.block_until_ready(positionwise_feed_forward(x, *params))
    assert out.shape == (B, L, d_in)
    assert jnp.allclose(out, ref, atol=5e-2, rtol=5e-2), "bf16 path mismatch"

    out32 = jax.block_until_ready(
        positionwise_feed_forward(x, *params, matmul_dtype=jnp.float32))
    assert jnp.allclose(out32, ref, atol=2e-3, rtol=2e-3), "f32 path mismatch"

    # --- test 2: lane-dense channels, multi-step grid with a partial last block
    B2, L2, d_in2, d_hid2 = 2, 132, 128, 256           # rows=264 -> tiles of 136 + 128
    kx2, kp2 = jax.random.split(kp)
    x2 = jax.random.normal(kx2, (B2, L2, d_in2), dtype=jnp.float32)
    params2 = _make_params(kp2, d_in2, d_hid2)
    ref2 = _reference(x2, *params2)
    out2 = jax.block_until_ready(positionwise_feed_forward(x2, *params2))
    assert out2.shape == (B2, L2, d_in2)
    assert jnp.allclose(out2, ref2, atol=5e-2, rtol=5e-2), "tiled path mismatch"

    # bf16 I/O variant (mem-bound option for v5e/v6e); loose tolerance.
    out2_bf16io = jax.block_until_ready(
        positionwise_feed_forward(x2, *params2, io_dtype=jnp.bfloat16))
    assert jnp.allclose(out2_bf16io, ref2, atol=2e-1, rtol=2e-1), "bf16-I/O mismatch"

    # --- test 3: forced d_hid-streaming path (v7x fallback), f32 for tightness -
    B3, L3, d_in3, d_hid3 = 2, 64, 128, 256
    kx3, kp3 = jax.random.split(kp2)
    x3 = jax.random.normal(kx3, (B3, L3, d_in3), dtype=jnp.float32)
    params3 = _make_params(kp3, d_in3, d_hid3)
    ref3 = _reference(x3, *params3)
    out3 = jax.block_until_ready(
        positionwise_feed_forward(x3, *params3, matmul_dtype=jnp.float32,
                                  hid_block=128, force_stream=True))
    assert jnp.allclose(out3, ref3, atol=2e-3, rtol=2e-3), "streaming path mismatch"

    print("KERNEL_OK")
</pallas_src>

<mosaic_0001>
module attributes {stable_mosaic.version = 11 : i64} {
  func.func @_ffn_ln_kernel(%arg0: i32, %arg1: memref<8x32xf32, #tpu.memory_space<vmem>>, %arg2: memref<32x64xbf16, #tpu.memory_space<vmem>>, %arg3: memref<1x64xf32, #tpu.memory_space<vmem>>, %arg4: memref<64x32xbf16, #tpu.memory_space<vmem>>, %arg5: memref<1x32xf32, #tpu.memory_space<vmem>>, %arg6: memref<1x32xf32, #tpu.memory_space<vmem>>, %arg7: memref<1x32xf32, #tpu.memory_space<vmem>>, %arg8: memref<8x32xf32, #tpu.memory_space<vmem>>) attributes {dimension_semantics = [#tpu.dimension_semantics<parallel>], iteration_bounds = array<i64: 2>, scalar_prefetch = 0 : i64, scratch_operands = 0 : i64, tpu.core_type = #tpu.core_type<tc>, window_params = [{transform_indices = @transform_0, window_bounds = array<i64: 8, 32>}, {pipeline_mode = #tpu.pipeline_mode<synchronous>, transform_indices = @transform_1, window_bounds = array<i64: 32, 64>}, {pipeline_mode = #tpu.pipeline_mode<synchronous>, transform_indices = @transform_2, window_bounds = array<i64: 1, 64>}, {pipeline_mode = #tpu.pipeline_mode<synchronous>, transform_indices = @transform_3, window_bounds = array<i64: 64, 32>}, {pipeline_mode = #tpu.pipeline_mode<synchronous>, transform_indices = @transform_4, window_bounds = array<i64: 1, 32>}, {pipeline_mode = #tpu.pipeline_mode<synchronous>, transform_indices = @transform_5, window_bounds = array<i64: 1, 32>}, {pipeline_mode = #tpu.pipeline_mode<synchronous>, transform_indices = @transform_6, window_bounds = array<i64: 1, 32>}, {transform_indices = @transform_7, window_bounds = array<i64: 8, 32>}]} {
    %c0 = arith.constant 0 : index
    %c0_0 = arith.constant 0 : index
    %0 = vector.load %arg1[%c0, %c0_0] : memref<8x32xf32, #tpu.memory_space<vmem>>, vector<8x32xf32>
    %1 = arith.truncf %0 : vector<8x32xf32> to vector<8x32xbf16>
    %c0_1 = arith.constant 0 : index
    %c0_2 = arith.constant 0 : index
    %2 = vector.load %arg2[%c0_1, %c0_2] : memref<32x64xbf16, #tpu.memory_space<vmem>>, vector<32x64xbf16>
    %cst = arith.constant dense<0.000000e+00> : vector<8x64xf32>
    %3 = tpu.matmul %1, %2, %cst {dimension_numbers = #tpu.dot_dimension_numbers<[1], [0], [0], [1], [0, 0, 1, 1], [], []>} : vector<8x32xbf16>, vector<32x64xbf16>, vector<8x64xf32> -> vector<8x64xf32>
    %c0_3 = arith.constant 0 : index
    %c0_4 = arith.constant 0 : index
    %4 = vector.load %arg3[%c0_3, %c0_4] : memref<1x64xf32, #tpu.memory_space<vmem>>, vector<1x64xf32>
    %5 = vector.broadcast %4 : vector<1x64xf32> to vector<8x64xf32>
    %6 = arith.addf %3, %5 : vector<8x64xf32>
    %cst_5 = arith.constant 0.000000e+00 : f32
    %7 = vector.broadcast %cst_5 : f32 to vector<8x64xf32>
    %8 = arith.maximumf %6, %7 : vector<8x64xf32>
    %9 = arith.truncf %8 : vector<8x64xf32> to vector<8x64xbf16>
    %c0_6 = arith.constant 0 : index
    %c0_7 = arith.constant 0 : index
    %10 = vector.load %arg4[%c0_6, %c0_7] : memref<64x32xbf16, #tpu.memory_space<vmem>>, vector<64x32xbf16>
    %cst_8 = arith.constant dense<0.000000e+00> : vector<8x32xf32>
    %11 = tpu.matmul %9, %10, %cst_8 {dimension_numbers = #tpu.dot_dimension_numbers<[1], [0], [0], [1], [0, 0, 1, 1], [], []>} : vector<8x64xbf16>, vector<64x32xbf16>, vector<8x32xf32> -> vector<8x32xf32>
    %c0_9 = arith.constant 0 : index
    %c0_10 = arith.constant 0 : index
    %12 = vector.load %arg5[%c0_9, %c0_10] : memref<1x32xf32, #tpu.memory_space<vmem>>, vector<1x32xf32>
    %13 = vector.broadcast %12 : vector<1x32xf32> to vector<8x32xf32>
    %14 = arith.addf %11, %13 : vector<8x32xf32>
    %15 = arith.addf %14, %0 : vector<8x32xf32>
    %c0_11 = arith.constant 0 : index
    %c0_12 = arith.constant 0 : index
    %16 = vector.load %arg6[%c0_11, %c0_12] : memref<1x32xf32, #tpu.memory_space<vmem>>, vector<1x32xf32>
    %c0_13 = arith.constant 0 : index
    %c0_14 = arith.constant 0 : index
    %17 = vector.load %arg7[%c0_13, %c0_14] : memref<1x32xf32, #tpu.memory_space<vmem>>, vector<1x32xf32>
    %cst_15 = arith.constant dense<0.000000e+00> : vector<8xf32>
    %18 = vector.multi_reduction <add>, %15, %cst_15 [1] : vector<8x32xf32> to vector<8xf32>
    %19 = vector.shape_cast %18 : vector<8xf32> to vector<8x1xf32>
    %cst_16 = arith.constant 3.200000e+01 : f32
    %20 = vector.broadcast %cst_16 : f32 to vector<8x1xf32>
    %21 = arith.divf %19, %20 : vector<8x1xf32>
    %22 = vector.broadcast %21 : vector<8x1xf32> to vector<8x32xf32>
    %23 = arith.subf %15, %22 : vector<8x32xf32>
    %24 = arith.mulf %23, %23 : vector<8x32xf32>
    %cst_17 = arith.constant dense<0.000000e+00> : vector<8xf32>
    %25 = vector.multi_reduction <add>, %24, %cst_17 [1] : vector<8x32xf32> to vector<8xf32>
    %26 = vector.shape_cast %25 : vector<8xf32> to vector<8x1xf32>
    %cst_18 = arith.constant 3.200000e+01 : f32
    %27 = vector.broadcast %cst_18 : f32 to vector<8x1xf32>
    %28 = arith.divf %26, %27 : vector<8x1xf32>
    %cst_19 = arith.constant 9.99999974E-6 : f32
    %29 = vector.broadcast %cst_19 : f32 to vector<8x1xf32>
    %30 = arith.addf %28, %29 : vector<8x1xf32>
    %31 = math.rsqrt %30 : vector<8x1xf32>
    %32 = vector.broadcast %31 : vector<8x1xf32> to vector<8x32xf32>
    %33 = arith.mulf %23, %32 : vector<8x32xf32>
    %34 = vector.broadcast %16 : vector<1x32xf32> to vector<8x32xf32>
    %35 = arith.mulf %33, %34 : vector<8x32xf32>
    %36 = vector.broadcast %17 : vector<1x32xf32> to vector<8x32xf32>
    %37 = arith.addf %35, %36 : vector<8x32xf32>
    %c0_20 = arith.constant 0 : index
    %c0_21 = arith.constant 0 : index
    %38 = vector.load %arg8[%c0_20, %c0_21] : memref<8x32xf32, #tpu.memory_space<vmem>>, vector<8x32xf32>
    tpu.vector_store %arg8[%c0_20, %c0_21], %37 {strides = array<i32>} : memref<8x32xf32, #tpu.memory_space<vmem>>, vector<8x32xf32>,
    return
  }
  func.func @transform_0(%arg0: i32) -> (i32, i32) {
    %c0_i32 = arith.constant 0 : i32
    %c0_i32_0 = arith.constant 0 : i32
    return %arg0, %c0_i32 : i32, i32
  }
  func.func @transform_1(%arg0: i32) -> (i32, i32) {
    %c0_i32 = arith.constant 0 : i32
    %c0_i32_0 = arith.constant 0 : i32
    %c0_i32_1 = arith.constant 0 : i32
    return %c0_i32, %c0_i32_0 : i32, i32
  }
  func.func @transform_2(%arg0: i32) -> (i32, i32) {
    %c0_i32 = arith.constant 0 : i32
    %c0_i32_0 = arith.constant 0 : i32
    %c0_i32_1 = arith.constant 0 : i32
    return %c0_i32, %c0_i32_0 : i32, i32
  }
  func.func @transform_3(%arg0: i32) -> (i32, i32) {
    %c0_i32 = arith.constant 0 : i32
    %c0_i32_0 = arith.constant 0 : i32
    %c0_i32_1 = arith.constant 0 : i32
    return %c0_i32, %c0_i32_0 : i32, i32
  }
  func.func @transform_4(%arg0: i32) -> (i32, i32) {
    %c0_i32 = arith.constant 0 : i32
    %c0_i32_0 = arith.constant 0 : i32
    %c0_i32_1 = arith.constant 0 : i32
    return %c0_i32, %c0_i32_0 : i32, i32
  }
  func.func @transform_5(%arg0: i32) -> (i32, i32) {
    %c0_i32 = arith.constant 0 : i32
    %c0_i32_0 = arith.constant 0 : i32
    %c0_i32_1 = arith.constant 0 : i32
    return %c0_i32, %c0_i32_0 : i32, i32
  }
  func.func @transform_6(%arg0: i32) -> (i32, i32) {
    %c0_i32 = arith.constant 0 : i32
    %c0_i32_0 = arith.constant 0 : i32
    %c0_i32_1 = arith.constant 0 : i32
    return %c0_i32, %c0_i32_0 : i32, i32
  }
  func.func @transform_7(%arg0: i32) -> (i32, i32) {
    %c0_i32 = arith.constant 0 : i32
    %c0_i32_0 = arith.constant 0 : i32
    return %arg0, %c0_i32 : i32, i32
  }
}

</mosaic_0001>

<llo_original>
// kernel: tpu_custom_call.1
$region0: #{tpu_custom_call.1}
  #allocation0 [shape = 'u32[]', space=smem, size = 0x4, offset = 0x4, fixed_abs, tag = 'smem constant byte address 0x4 - core index']
  #allocation1 [shape = 'u32[72,128]{1,0:T(1,128)}', space=vmem, size = 0x9000, scoped, tag = 'internal scratch']
  %s0 = inlined_call_operand.vmem [shape: f32[16,32], index: 0, kind: input, shape index: {}]
  %s1 = inlined_call_operand.vmem [shape: bf16[32,64], index: 1, kind: input, shape index: {}]
  %s2 = inlined_call_operand.vmem [shape: f32[1,64], index: 2, kind: input, shape index: {}]
  %s3 = inlined_call_operand.vmem [shape: bf16[64,32], index: 3, kind: input, shape index: {}]
  %s4 = inlined_call_operand.vmem [shape: f32[1,32], index: 4, kind: input, shape index: {}]
  %s5 = inlined_call_operand.vmem [shape: f32[1,32], index: 5, kind: input, shape index: {}]
  %s6 = inlined_call_operand.vmem [shape: f32[1,32], index: 6, kind: input, shape index: {}]
  %s7 = inlined_call_operand.hbm [shape: f32[16,32], index: 7, kind: output, shape index: {}]
  %s8 = sld [smem:[#allocation0]]
  $region61: #{tpu_custom_call.1} parent=0
    _
  %s10 = ssub.s32 1, %s8
  %s11 = scalar_select 0, %s10, %s8
  $region1: #{tpu_custom_call.1} parent=0
    #allocation2 [shape = 'u8[8192]{0}', space=vmem, size = 0x2000, scoped, tag = 'output window, operand 0']
    #allocation3 [shape = 's32[2]{0}', space=sflag, size = 0x8, scoped, tag = 'scoped memory for tpu_custom_call.1']
    %12 = vsyncpa [#allocation3], 0
    %s13 = scalar_lea.sflag [#allocation3], 1
    %14 = vsyncpa %s13, 0
    loop: start=0, step=1, limit=4
    $region2: #{tpu_custom_call.1} parent=1 // loop_pre_header
      _
    $region3: #{tpu_custom_call.1} parent=1 // loop_header
      %s16 = sphi 0, %s20
      %p17 = scmp.ge.s32.totalorder %s16, 4
      %s26 = sphi 0, %s28
      %s29 = sphi 0, %s26
      %s30 = sphi 0, %s29
      %s46 = sphi 0, %s30
      %s50 = sphi 0, %s50
      %s52 = sphi 0, %s50
      %s53 = sphi 0, %s52
      %s67 = sphi 0, %s53
      %s71 = sphi 0, %s71
      %s73 = sphi 0, %s71
      %s74 = sphi 0, %s73
      %s88 = sphi 0, %s74
      %s92 = sphi 0, %s92
      %s94 = sphi 0, %s92
      %s95 = sphi 0, %s94
      %s109 = sphi 0, %s95
      %s113 = sphi 0, %s113
      %s115 = sphi 0, %s113
      %s116 = sphi 0, %s115
      %s130 = sphi 0, %s116
      %s134 = sphi 0, %s134
      %s136 = sphi 0, %s134
      %s137 = sphi 0, %s136
      %s151 = sphi 0, %s137
      %s155 = sphi 0, %s155
      %s157 = sphi 0, %s155
      %s158 = sphi 0, %s157
      %s172 = sphi 0, %s158
      %s178 = sphi 0, %s180
      %s181 = sphi 0, %s178
      %s182 = sphi 0, %s181
      %s198 = sphi 0, %s182
    $region4: #{tpu_custom_call.1} parent=1 // loop_header_branch
      %19 = sbr.rel (%p17) target = $region8
    $region5: #{tpu_custom_call.1} parent=1 // loop_body
      %s21 = ssub.s32 %s16, 1
      %s22 = ssub.s32 %s16, 2
      %s23 = sadd.s32 %s16, 1
      %s24 = ssub.s32 %s16, %s23
      %p25 = scmp.eq.s32.totalorder %s24, 0
      %s27 = sadd.s32 %s26, 1
      %s28 = scalar_select %p25, %s26, %s27
      %p31 = pneg %p25
      %p32 = scmp.eq.s32.totalorder %s16, 1
      %p33 = por %p31, %p32
      %p34 = scmp.ne.s32.totalorder %s26, %s29
      %p35 = scmp.eq.s32.totalorder %s16, 0
      %p36 = por %p34, %p35
      %p37 = scmp.ne.s32.totalorder %s26, %s29
      %p38 = scmp.eq.s32.totalorder %s21, 1
      %p39 = por %p37, %p38
      %p40 = scmp.ne.s32.totalorder %s29, %s30
      %p41 = scmp.eq.s32.totalorder %s21, 0
      %p42 = por %p40, %p41
      %p43 = scmp.ne.s32.totalorder %s29, %s30
      %p44 = scmp.eq.s32.totalorder %s22, 1
      %p45 = por %p43, %p44
      %p47 = scmp.ne.s32.totalorder %s30, %s46
      %p48 = scmp.eq.s32.totalorder %s22, 0
      %p49 = por %p47, %p48
      %s51 = sadd.s32 %s50, 1
      %p54 = scmp.eq.s32.totalorder %s16, 1
      %p55 = scmp.ne.s32.totalorder %s50, %s52
      %p56 = scmp.eq.s32.totalorder %s16, 0
      %p57 = por %p55, %p56
      %p58 = scmp.ne.s32.totalorder %s50, %s52
      %p59 = scmp.eq.s32.totalorder %s21, 1
      %p60 = por %p58, %p59
      %p61 = scmp.ne.s32.totalorder %s52, %s53
      %p62 = scmp.eq.s32.totalorder %s21, 0
      %p63 = por %p61, %p62
      %p64 = scmp.ne.s32.totalorder %s52, %s53
      %p65 = scmp.eq.s32.totalorder %s22, 1
      %p66 = por %p64, %p65
      %p68 = scmp.ne.s32.totalorder %s53, %s67
      %p69 = scmp.eq.s32.totalorder %s22, 0
      %p70 = por %p68, %p69
      %s72 = sadd.s32 %s71, 1
      %p75 = scmp.eq.s32.totalorder %s16, 1
      %p76 = scmp.ne.s32.totalorder %s71, %s73
      %p77 = scmp.eq.s32.totalorder %s16, 0
      %p78 = por %p76, %p77
      %p79 = scmp.ne.s32.totalorder %s71, %s73
      %p80 = scmp.eq.s32.totalorder %s21, 1
      %p81 = por %p79, %p80
      %p82 = scmp.ne.s32.totalorder %s73, %s74
      %p83 = scmp.eq.s32.totalorder %s21, 0
      %p84 = por %p82, %p83
      %p85 = scmp.ne.s32.totalorder %s73, %s74
      %p86 = scmp.eq.s32.totalorder %s22, 1
      %p87 = por %p85, %p86
      %p89 = scmp.ne.s32.totalorder %s74, %s88
      %p90 = scmp.eq.s32.totalorder %s22, 0
      %p91 = por %p89, %p90
      %s93 = sadd.s32 %s92, 1
      %p96 = scmp.eq.s32.totalorder %s16, 1
      %p97 = scmp.ne.s32.totalorder %s92, %s94
      %p98 = scmp.eq.s32.totalorder %s16, 0
      %p99 = por %p97, %p98
      %p100 = scmp.ne.s32.totalorder %s92, %s94
      %p101 = scmp.eq.s32.totalorder %s21, 1
      %p102 = por %p100, %p101
      %p103 = scmp.ne.s32.totalorder %s94, %s95
      %p104 = scmp.eq.s32.totalorder %s21, 0
      %p105 = por %p103, %p104
      %p106 = scmp.ne.s32.totalorder %s94, %s95
      %p107 = scmp.eq.s32.totalorder %s22, 1
      %p108 = por %p106, %p107
      %p110 = scmp.ne.s32.totalorder %s95, %s109
      %p111 = scmp.eq.s32.totalorder %s22, 0
      %p112 = por %p110, %p111
      %s114 = sadd.s32 %s113, 1
      %p117 = scmp.eq.s32.totalorder %s16, 1
      %p118 = scmp.ne.s32.totalorder %s113, %s115
      %p119 = scmp.eq.s32.totalorder %s16, 0
      %p120 = por %p118, %p119
      %p121 = scmp.ne.s32.totalorder %s113, %s115
      %p122 = scmp.eq.s32.totalorder %s21, 1
      %p123 = por %p121, %p122
      %p124 = scmp.ne.s32.totalorder %s115, %s116
      %p125 = scmp.eq.s32.totalorder %s21, 0
      %p126 = por %p124, %p125
      %p127 = scmp.ne.s32.totalorder %s115, %s116
      %p128 = scmp.eq.s32.totalorder %s22, 1
      %p129 = por %p127, %p128
      %p131 = scmp.ne.s32.totalorder %s116, %s130
      %p132 = scmp.eq.s32.totalorder %s22, 0
      %p133 = por %p131, %p132
      %s135 = sadd.s32 %s134, 1
      %p138 = scmp.eq.s32.totalorder %s16, 1
      %p139 = scmp.ne.s32.totalorder %s134, %s136
      %p140 = scmp.eq.s32.totalorder %s16, 0
      %p141 = por %p139, %p140
      %p142 = scmp.ne.s32.totalorder %s134, %s136
      %p143 = scmp.eq.s32.totalorder %s21, 1
      %p144 = por %p142, %p143
      %p145 = scmp.ne.s32.totalorder %s136, %s137
      %p146 = scmp.eq.s32.totalorder %s21, 0
      %p147 = por %p145, %p146
      %p148 = scmp.ne.s32.totalorder %s136, %s137
      %p149 = scmp.eq.s32.totalorder %s22, 1
      %p150 = por %p148, %p149
      %p152 = scmp.ne.s32.totalorder %s137, %s151
      %p153 = scmp.eq.s32.totalorder %s22, 0
      %p154 = por %p152, %p153
      %s156 = sadd.s32 %s155, 1
      %p159 = scmp.eq.s32.totalorder %s16, 1
      %p160 = scmp.ne.s32.totalorder %s155, %s157
      %p161 = scmp.eq.s32.totalorder %s16, 0
      %p162 = por %p160, %p161
      %p163 = scmp.ne.s32.totalorder %s155, %s157
      %p164 = scmp.eq.s32.totalorder %s21, 1
      %p165 = por %p163, %p164
      %p166 = scmp.ne.s32.totalorder %s157, %s158
      %p167 = scmp.eq.s32.totalorder %s21, 0
      %p168 = por %p166, %p167
      %p169 = scmp.ne.s32.totalorder %s157, %s158
      %p170 = scmp.eq.s32.totalorder %s22, 1
      %p171 = por %p169, %p170
      %p173 = scmp.ne.s32.totalorder %s158, %s172
      %p174 = scmp.eq.s32.totalorder %s22, 0
      %p175 = por %p173, %p174
      %s176 = ssub.s32 %s16, %s23
      %p177 = scmp.eq.s32.totalorder %s176, 0
      %s179 = sadd.s32 %s178, 1
      %s180 = scalar_select %p177, %s178, %s179
      %p183 = pneg %p177
      %p184 = scmp.eq.s32.totalorder %s16, 1
      %p185 = por %p183, %p184
      %p186 = scmp.ne.s32.totalorder %s178, %s181
      %p187 = scmp.eq.s32.totalorder %s16, 0
      %p188 = por %p186, %p187
      %p189 = scmp.ne.s32.totalorder %s178, %s181
      %p190 = scmp.eq.s32.totalorder %s21, 1
      %p191 = por %p189, %p190
      %p192 = scmp.ne.s32.totalorder %s181, %s182
      %p193 = scmp.eq.s32.totalorder %s21, 0
      %p194 = por %p192, %p193
      %p195 = scmp.ne.s32.totalorder %s181, %s182
      %p196 = scmp.eq.s32.totalorder %s22, 1
      %p197 = por %p195, %p196
      %p199 = scmp.ne.s32.totalorder %s182, %s198
      %p200 = scmp.eq.s32.totalorder %s22, 0
      %p201 = por %p199, %p200
      %p202 = scmp.le.s32.totalorder 1, %s16
      %p203 = scmp.lt.s32.totalorder %s16, 3
      %p204 = pnand %p202, %p203
      %p205 = pneg %p204
      // Predicated region
      $region9: #{tpu_custom_call.1} parent=5 // pred_check
        _
      $region10: #{tpu_custom_call.1} parent=5 // pred_check_branch
        %207 = sbr.rel (%p204) target = $region12
      $region11: #{tpu_custom_call.1} parent=5 // pred_region
        %s208 = ssub.s32 %s16, 1
        // Predicated region
        $region13: #{tpu_custom_call.1} parent=11 // pred_check
          %p209 = pneg %p63
        $region14: #{tpu_custom_call.1} parent=11 // pred_check_branch
          %211 = sbr.rel (%p209) target = $region16
        $region15: #{tpu_custom_call.1} parent=11 // pred_region
          _
        $region16: #{tpu_custom_call.1} parent=11 // pred_fallthru
          _
        // Predicated region
        $region17: #{tpu_custom_call.1} parent=11 // pred_check
          %p212 = pneg %p84
        $region18: #{tpu_custom_call.1} parent=11 // pred_check_branch
          %214 = sbr.rel (%p212) target = $region20
        $region19: #{tpu_custom_call.1} parent=11 // pred_region
          _
        $region20: #{tpu_custom_call.1} parent=11 // pred_fallthru
          _
        // Predicated region
        $region21: #{tpu_custom_call.1} parent=11 // pred_check
          %p215 = pneg %p105
        $region22: #{tpu_custom_call.1} parent=11 // pred_check_branch
          %217 = sbr.rel (%p215) target = $region24
        $region23: #{tpu_custom_call.1} parent=11 // pred_region
          _
        $region24: #{tpu_custom_call.1} parent=11 // pred_fallthru
          _
        // Predicated region
        $region25: #{tpu_custom_call.1} parent=11 // pred_check
          %p218 = pneg %p126
        $region26: #{tpu_custom_call.1} parent=11 // pred_check_branch
          %220 = sbr.rel (%p218) target = $region28
        $region27: #{tpu_custom_call.1} parent=11 // pred_region
          _
        $region28: #{tpu_custom_call.1} parent=11 // pred_fallthru
          _
        // Predicated region
        $region29: #{tpu_custom_call.1} parent=11 // pred_check
          %p221 = pneg %p147
        $region30: #{tpu_custom_call.1} parent=11 // pred_check_branch
          %223 = sbr.rel (%p221) target = $region32
        $region31: #{tpu_custom_call.1} parent=11 // pred_region
          _
        $region32: #{tpu_custom_call.1} parent=11 // pred_fallthru
          _
        // Predicated region
        $region33: #{tpu_custom_call.1} parent=11 // pred_check
          %p224 = pneg %p168
        $region34: #{tpu_custom_call.1} parent=11 // pred_check_branch
          %226 = sbr.rel (%p224) target = $region36
        $region35: #{tpu_custom_call.1} parent=11 // pred_region
          _
        $region36: #{tpu_custom_call.1} parent=11 // pred_fallthru
          _
      $region12: #{tpu_custom_call.1} parent=5 // pred_fallthru
        _
      %p227 = scmp.lt.s32.totalorder %s16, 2
      // Predicated region
      $region37: #{tpu_custom_call.1} parent=5 // pred_check
        %p228 = pneg %p227
      $region38: #{tpu_custom_call.1} parent=5 // pred_check_branch
        %230 = sbr.rel (%p228) target = $region40
      $region39: #{tpu_custom_call.1} parent=5 // pred_region
        // Predicated region
        $region41: #{tpu_custom_call.1} parent=39 // pred_check
          %p231 = pneg %p36
        $region42: #{tpu_custom_call.1} parent=39 // pred_check_branch
          %233 = sbr.rel (%p231) target = $region44
        $region43: #{tpu_custom_call.1} parent=39 // pred_region
          %p234 = scmp.lt.s32.totalorder %s16, 1
          %s235 = scalar_select %p234, %s16, 1
          %s236 = smul.addr %s235, 8
          %s237 = scalar_lea.vmem %s0, %s236
        $region44: #{tpu_custom_call.1} parent=39 // pred_fallthru
          _
      $region40: #{tpu_custom_call.1} parent=5 // pred_fallthru
        _
      %p238 = scmp.le.s32.totalorder 1, %s16
      %p239 = scmp.lt.s32.totalorder %s16, 3
      %p240 = pnand %p238, %p239
      %p241 = pneg %p240
      // Predicated region
      $region45: #{tpu_custom_call.1} parent=5 // pred_check
        _
      $region46: #{tpu_custom_call.1} parent=5 // pred_check_branch
        %243 = sbr.rel (%p240) target = $region48
      $region47: #{tpu_custom_call.1} parent=5 // pred_region
        %s244 = ssub.s32 %s16, 1
        %p245 = scmp.lt.s32.totalorder %s21, 1
        %s246 = scalar_select %p245, %s21, 1
        %s247 = smul.addr %s246, 8
        %s248 = scalar_lea.vmem %s0, %s247
        %p249 = pneg %p42
        %p250 = pneg %p39
        %p251 = pneg %p63
        %p252 = pneg %p60
        %p253 = pneg %p84
        %p254 = pneg %p81
        %p255 = pneg %p105
        %p256 = pneg %p102
        %p257 = pneg %p126
        %p258 = pneg %p123
        %p259 = pneg %p147
        %p260 = pneg %p144
        %p261 = pneg %p168
        %p262 = pneg %p165
        %p263 = pneg %p194
        %p264 = pneg %p191
        %s265 = sand.u32 %s181, 1
        %s266 = scalar_lea.sflag [#allocation3], %s265
        %s267 = sand.u32 %s181, 1
        %s268 = smul.addr %s267, 8
        %s269 = scalar_lea.vmem [#allocation2], %s268
        %p270 = scmp.lt.s32.totalorder %s21, 1
        %s271 = scalar_select %p270, %s21, 1
        %s272 = smul.addr %s271, 8
        %s273 = scalar_lea.vmem %s0, %s272
        %v275 = vld [vmem:[%s273] sm:$0xff]
        %v276 = vpack.c.bf16 %v275, %v275
        %v277 = vld [vmem:[%s1] sm:$0xf]
        %v278 = vld [vmem:[%s1 + $0x4] sm:$0xf]
        %v279 = vld [vmem:[%s1 + $0x8] sm:$0xf]
        %v280 = vld [vmem:[%s1 + $0xc] sm:$0xf]
        %v281 = vld [vmem:[%s2] sm:$0x1]
        %v283 = vperm.slane %v281, 0
        %v289 = vunpack.c.l.b16 %v277
        %v290 = vunpack.c.l.b16 %v278
        %v291 = vunpack.c.l.b16 %v279
        %v292 = vunpack.c.l.b16 %v280
        %v293 = vpack.c.b16 %v290, %v289
        %v294 = vpack.c.b16 %v292, %v291
        %vm297 = vcmask 261120
        %v299 = vsel %vm297, %v276, 0
        %301 = vmatpush.bf16.msra.mxu0 0
        %302 = vmatpush.bf16.msra.mxu0 0
        %303 = vmatpush.bf16.msra.mxu0 0
        %304 = vmatpush.bf16.msra.mxu0 0
        %305 = vmatpush.bf16.msra.mxu0 0
        %306 = vmatpush.bf16.msra.mxu0 0
        %307 = vmatpush.bf16.msra.mxu0 %v294
        %308 = vmatpush.bf16.msra.mxu0 %v293
        %309 = vmatmul.bf16.gmra.mxu0 %v299
        %v310 = vpop.f32.mrf.mxu0
        %v311 = vadd.f32 %v283, %v310
        %v312 = vpop.f32.mrf.mxu0
        %313 = vdwg.mxu0
        %v314 = vmax.f32 %v311, 0.0
        %v315 = vpack.c.bf16 %v314, %v314
        %v316 = vld [vmem:[%s3] sm:$0xf]
        %v317 = vld [vmem:[%s3 + $0x4] sm:$0xf]
        %v318 = vld [vmem:[%s3 + $0x8] sm:$0xf]
        %v319 = vld [vmem:[%s3 + $0xc] sm:$0xf]
        %v320 = vld [vmem:[%s3 + $0x10] sm:$0xf]
        %v321 = vld [vmem:[%s3 + $0x14] sm:$0xf]
        %v322 = vld [vmem:[%s3 + $0x18] sm:$0xf]
        %v323 = vld [vmem:[%s3 + $0x1c] sm:$0xf]
        %v324 = vld [vmem:[%s4] sm:$0x1]
        %v326 = vperm.slane %v324, 0
        %v336 = vunpack.c.l.b16 %v316
        %v337 = vunpack.c.l.b16 %v317
        %v338 = vunpack.c.l.b16 %v318
        %v339 = vunpack.c.l.b16 %v319
        %v340 = vunpack.c.l.b16 %v320
        %v341 = vunpack.c.l.b16 %v321
        %v342 = vunpack.c.l.b16 %v322
        %v343 = vunpack.c.l.b16 %v323
        %v344 = vpack.c.b16 %v337, %v336
        %v345 = vpack.c.b16 %v339, %v338
        %v346 = vpack.c.b16 %v341, %v340
        %v347 = vpack.c.b16 %v343, %v342
        %vm352 = vcmask 523264
        %v354 = vsel %vm352, %v315, 0
        %356 = vmatpush.bf16.msra.mxu0 0
        %357 = vmatpush.bf16.msra.mxu0 0
        %358 = vmatpush.bf16.msra.mxu0 0
        %359 = vmatpush.bf16.msra.mxu0 0
        %360 = vmatpush.bf16.msra.mxu0 %v347
        %361 = vmatpush.bf16.msra.mxu0 %v346
        %362 = vmatpush.bf16.msra.mxu0 %v345
        %363 = vmatpush.bf16.msra.mxu0 %v344
        %364 = vmatmul.bf16.gmra.mxu0 %v354
        %v365 = vpop.f32.mrf.mxu0
        %v366 = vadd.f32 %v326, %v365
        %v367 = vpop.f32.mrf.mxu0
        %368 = vdwg.mxu0
        %v369 = vadd.f32 %v366, %v275
        %v370 = vld [vmem:[%s5] sm:$0x1]
        %v371 = vld [vmem:[%s6] sm:$0x1]
        %v372 = vsel %vm297, %v369, 0.0
        %373 = vadd.xlane.f32.xlu0 %v372
        %v374 = vpop.xlane.xlu0 %373
        %v375 = vrcp.pop 32.0
        %v376 = vmul.f32 32.0, %v375
        %v377 = vsub.f32 1.0, %v376
        %v378 = vmul.f32 %v375, %v377
        %v379 = vadd.f32 %v375, %v378
        %vm380 = vweird.f32 %v375
        %v381 = vsel %vm380, %v375, %v379
        %v382 = vmul.f32 %v374, %v381
        %v383 = vsub.f32 %v369, %v382
        %v384 = vmul.f32 %v383, %v383
        %v385 = vsel %vm297, %v384, 0.0
        %386 = vadd.xlane.f32.xlu0 %v385
        %v387 = vpop.xlane.xlu0 %386
        %v388 = vmul.f32 %v387, %v381
        %v389 = vadd.f32 %v388, 1e-05
        %v390 = vrsqrt.pop %v389
        %v391 = vmul.f32 %v390, %v389
        %v392 = vmul.f32 %v391, %v390
        %v393 = vmul.f32 0.5, %v392
        %v394 = vsub.f32 1.5, %v393
        %v395 = vmul.f32 %v390, %v394
        %vm396 = vweird.f32 %v389
        %vm397 = vweird.f32 %v390
        %vm398 = vmor %vm396, %vm397
        %v399 = vsel %vm398, %v390, %v395
        %v400 = vmul.f32 %v383, %v399
        %v402 = vperm.slane %v370, 0
        %v404 = vmul.f32 %v400, %v402
        %v406 = vperm.slane %v371, 0
        %v408 = vadd.f32 %v404, %v406
        %409 = vst.msk [vmem:[%s269] sm:$0xff] %vm297, %v408
        %s410 = sand.u32 %s181, 1
        %s411 = scalar_lea.sflag [#allocation3], %s410
        %s412 = sand.u32 %s181, 1
        %s413 = smul.addr %s412, 8
        %s414 = scalar_lea.vmem [#allocation2], %s413
        // Predicated region
        $region49: #{tpu_custom_call.1} parent=47 // pred_check
          %p415 = pneg %p191
        $region50: #{tpu_custom_call.1} parent=47 // pred_check_branch
          %417 = sbr.rel (%p415) target = $region52
        $region51: #{tpu_custom_call.1} parent=47 // pred_region
          %419 = vsyncadd %s411, 0
          %s420 = smul.addr %s21, 8
          %s421 = scalar_lea.hbm %s7, %s420
          %s423 = sshll.u32 %s414, 4
          %s424 = int_to_ptr.vmem [resolvable:$true] %s423
          %s425 = sshll.u32 %s421, 4
          %s426 = int_to_ptr.hbm [resolvable:$true] %s425
          %428 = dma.vmem_to_hbm [thread:$0]  %s424, 128, %s426, %s411
        $region52: #{tpu_custom_call.1} parent=47 // pred_fallthru
          _
      $region48: #{tpu_custom_call.1} parent=5 // pred_fallthru
        _
      %p429 = scmp.le.s32.totalorder 2, %s16
      // Predicated region
      $region53: #{tpu_custom_call.1} parent=5 // pred_check
        %p430 = pneg %p429
      $region54: #{tpu_custom_call.1} parent=5 // pred_check_branch
        %432 = sbr.rel (%p430) target = $region56
      $region55: #{tpu_custom_call.1} parent=5 // pred_region
        %s433 = ssub.s32 %s16, 2
        // Predicated region
        $region57: #{tpu_custom_call.1} parent=55 // pred_check
          %p434 = pneg %p197
        $region58: #{tpu_custom_call.1} parent=55 // pred_check_branch
          %436 = sbr.rel (%p434) target = $region60
        $region59: #{tpu_custom_call.1} parent=55 // pred_region
          %s437 = sand.u32 %s182, 1
          %s438 = scalar_lea.sflag [#allocation3], %s437
          %s439 = sand.u32 %s182, 1
          %s440 = smul.addr %s439, 8
          %s441 = scalar_lea.vmem [#allocation2], %s440
          %443 = dma.done %s438, 128
        $region60: #{tpu_custom_call.1} parent=55 // pred_fallthru
          _
      $region56: #{tpu_custom_call.1} parent=5 // pred_fallthru
        _
    $region6: #{tpu_custom_call.1} parent=1 // loop_footer
      %s20 = sadd.s32 1, %s16
    $region7: #{tpu_custom_call.1} parent=1 // loop_footer_branch
      %15 = sbr.rel target = $region3
    $region8: #{tpu_custom_call.1} parent=1 // loop_exit
      _
    %444 = vsyncpa [#allocation3], 1
    %s445 = scalar_lea.sflag [#allocation3], 1
    %446 = vsyncpa %s445, 1

</llo_original>
